<compile_context>
chip_gen: v7x
topology: tpu7x:2x2x1
jax: 0.10.0
libtpu: 0.0.40
codegen_flags: <defaults>
</compile_context>

<pallas_src>
import functools

import numpy as np
import jax
import jax.numpy as jnp
from jax import lax
from jax.experimental import pallas as pl
from jax.experimental.pallas import tpu as pltpu


def _l2_normalize(x):
    # F.normalize(dim=1): v / max(||v||_2, 1e-12)  (rsqrt form: one EUP op).
    x = x.astype(jnp.float32)
    ss = jnp.sum(x * x, axis=1, keepdims=True)
    return x * lax.rsqrt(jnp.maximum(ss, 1e-24))


def infonce_kernel(zq_ref, zk_ref, out_ref, acc_ref, *, precision):
    """One (query-tile, key-tile) step of the streamed denominator.

    zq_ref : (T, D) normalized rows, pre-scaled by 1/temperature (matmul dtype)
    zk_ref : (T, D) normalized rows (matmul dtype)
    out_ref: (T, 1) f32  -> log(sum_{c != r} exp(sim[r, c] / T))
    acc_ref: (T, 1) f32  VMEM accumulator across the key axis
    """
    qi = pl.program_id(0)
    ki = pl.program_id(1)
    nk = pl.num_programs(1)

    @pl.when(ki == 0)
    def _():
        acc_ref[...] = jnp.zeros_like(acc_ref)

    # Contract D on both operands -> MXU consumes the RHS along D directly
    # (no transpose through the XLU).  Result is already sim / T.
    dn = (((1,), (1,)), ((), ()))
    s = lax.dot_general(zq_ref[...], zk_ref[...], dimension_numbers=dn,
                        preferred_element_type=jnp.float32,
                        precision=precision)                    # (TQ, TK)

    # |sim| <= 1 so exp(sim/T) <= exp(1/T); safe in f32 for T >= ~0.012
    # (matches the reference, which has no max-subtraction).
    e = jnp.exp(s)

    # Self-similarity entries exist only in diagonal (qi == ki) tiles; gate
    # the mask on the scalar predicate so off-diagonal tiles do ~no extra work.
    tq, tk = s.shape
    local_eq = (lax.broadcasted_iota(jnp.int32, (tq, tk), 0)
                == lax.broadcasted_iota(jnp.int32, (tq, tk), 1))
    drop_self = jnp.logical_and(qi == ki, local_eq)
    e = jnp.where(drop_self, 0.0, e)

    # Single cross-lane reduction per step (XLU), accumulated in f32.
    acc_ref[...] += jnp.sum(e, axis=1, keepdims=True)

    @pl.when(ki == nk - 1)
    def _():
        out_ref[...] = jnp.log(acc_ref[...])


def _pick_row_tile(n, max_tile):
    """Largest tile <= max_tile dividing n; prefers multiples of 256 (v6e/v7x
    MXU width), then 128, then 8.  Falls back to n only if n is small."""
    if n <= max_tile:
        return n
    for step in (256, 128, 8):
        t = (max_tile // step) * step
        while t >= step:
            if n % t == 0:
                return t
            t -= step
    if n <= 4096:
        return n
    raise ValueError(
        f"Cannot find a row tile <= {max_tile} dividing {n}; pad the batch "
        f"to a multiple of 8.")


def infonce_loss(emb_i, emb_j, *, batch_size, temperature=0.05,
                 matmul_dtype=jnp.bfloat16, max_row_tile=256,
                 vmem_limit_bytes=None):
    assert emb_i.shape == emb_j.shape and emb_i.shape[0] == batch_size
    # No max-subtraction inside the kernel -> f32 exp overflows below T~0.0115.
    if float(temperature) < 1.0 / 85.0:
        raise ValueError("temperature too small for the unshifted exp path "
                         "(requires temperature >= ~0.012).")

    b, d = emb_i.shape
    n2 = 2 * b
    inv_t = 1.0 / float(temperature)

    # --- One-time O(B*D) preprocessing in the wrapper (XLA) -----------------
    zi = _l2_normalize(emb_i)                       # (B, D) f32
    zj = _l2_normalize(emb_j)                       # (B, D) f32
    pos_sum = jnp.sum(zi * zj)                      # sum_k  z_i[k] . z_j[k]
    z = jnp.concatenate([zi, zj], axis=0)           # (2B, D) f32
    zq = (z * inv_t).astype(matmul_dtype)           # query operand (1/T folded)
    zk = z.astype(matmul_dtype)                     # key operand

    # --- Tile selection ------------------------------------------------------
    cap = max_row_tile
    if d > 4096:                                    # keep block VMEM modest (v7x: 64 MiB)
        cap = min(cap, 128)
    t = _pick_row_tile(n2, cap)
    n_tiles = n2 // t

    is_f32 = np.dtype(matmul_dtype) == np.dtype(np.float32)
    precision = lax.Precision.HIGHEST if is_f32 else None
    kernel = functools.partial(infonce_kernel, precision=precision)

    q_spec = pl.BlockSpec((t, d), lambda qi, ki: (qi, 0))
    k_spec = pl.BlockSpec((t, d), lambda qi, ki: (ki, 0))
    o_spec = pl.BlockSpec((t, 1), lambda qi, ki: (qi, 0))

    itemsize = np.dtype(matmul_dtype).itemsize
    cost = pl.CostEstimate(
        flops=2 * n2 * n2 * d,
        transcendentals=n2 * n2,
        bytes_accessed=(n_tiles * n2 * d + n2 * d) * itemsize + n2 * 4)

    cp_kwargs = dict(dimension_semantics=("parallel", "arbitrary"))
    if vmem_limit_bytes is not None:
        cp_kwargs["vmem_limit_bytes"] = int(vmem_limit_bytes)

    log_denom = pl.pallas_call(
        kernel,
        out_shape=jax.ShapeDtypeStruct((n2, 1), jnp.float32),
        grid_spec=pltpu.PrefetchScalarGridSpec(
            num_scalar_prefetch=0,
            grid=(n_tiles, n_tiles),
            in_specs=[q_spec, k_spec],
            out_specs=o_spec,
            scratch_shapes=[pltpu.VMEM((t, 1), jnp.float32)],
        ),
        compiler_params=pltpu.CompilerParams(**cp_kwargs),
        cost_estimate=cost,
    )(zq, zk)

    # loss = mean_r [ -pos_r/T + log(denominator_r) ];  pos for row r and row
    # r+B are the same dot product, hence the factor 2 on pos_sum.
    return (jnp.sum(log_denom) - 2.0 * inv_t * pos_sum) / float(n2)


def infonce_loss_ref(emb_i, emb_j, *, batch_size, temperature=0.05):
    """Pure-JAX reference mirroring the PyTorch module."""
    def normalize(x):
        nrm = jnp.sqrt(jnp.sum(x * x, axis=1, keepdims=True))
        return x / jnp.maximum(nrm, 1e-12)

    z = jnp.concatenate([normalize(emb_i), normalize(emb_j)], axis=0)
    sim = z @ z.T
    n = 2 * batch_size
    sim_ij = jnp.diagonal(sim, offset=batch_size)
    sim_ji = jnp.diagonal(sim, offset=-batch_size)
    positives = jnp.concatenate([sim_ij, sim_ji], axis=0)
    nominator = jnp.exp(positives / temperature)
    neg_mask = 1.0 - jnp.eye(n, dtype=jnp.float32)
    denominator = jnp.sum(neg_mask * jnp.exp(sim / temperature), axis=1)
    loss_partial = -jnp.log(nominator / denominator)
    return jnp.sum(loss_partial) / n


if __name__ == "__main__":
    temperature = 0.05
    hidden = 32

    # Case 1: tiny shapes (single-tile path), f32 operands (precision=HIGHEST).
    batch_size = 4
    k_i, k_j = jax.random.split(jax.random.PRNGKey(0))
    emb_i = jax.random.normal(k_i, (batch_size, hidden), dtype=jnp.float32)
    emb_j = jax.random.normal(k_j, (batch_size, hidden), dtype=jnp.float32)
    ref = infonce_loss_ref(emb_i, emb_j, batch_size=batch_size,
                           temperature=temperature)
    loss_f32 = jax.block_until_ready(
        infonce_loss(emb_i, emb_j, batch_size=batch_size,
                     temperature=temperature, matmul_dtype=jnp.float32))
    assert jnp.allclose(loss_f32, ref, rtol=1e-4, atol=1e-4), (loss_f32, ref)

    # Case 2: force the multi-tile (4x4 grid) streaming path, f32 operands.
    batch_size2 = 16
    k_i2, k_j2 = jax.random.split(jax.random.PRNGKey(1))
    emb_i2 = jax.random.normal(k_i2, (batch_size2, hidden), dtype=jnp.float32)
    emb_j2 = jax.random.normal(k_j2, (batch_size2, hidden), dtype=jnp.float32)
    ref2 = infonce_loss_ref(emb_i2, emb_j2, batch_size=batch_size2,
                            temperature=temperature)
    loss2 = jax.block_until_ready(
        infonce_loss(emb_i2, emb_j2, batch_size=batch_size2,
                     temperature=temperature, matmul_dtype=jnp.float32,
                     max_row_tile=8))
    assert jnp.allclose(loss2, ref2, rtol=1e-4, atol=1e-4), (loss2, ref2)

    # Case 3: default bf16 MXU fast path (f32 accumulation) — looser tolerance
    # (bf16 logit error enters the exponent scaled by 1/T).
    loss_bf16 = jax.block_until_ready(
        infonce_loss(emb_i, emb_j, batch_size=batch_size,
                     temperature=temperature))
    assert jnp.allclose(loss_bf16, ref, rtol=5e-2, atol=2e-1), (loss_bf16, ref)

    print("KERNEL_OK")
</pallas_src>

<mosaic_0001>
module attributes {stable_mosaic.version = 11 : i64} {
  func.func @infonce_kernel(%arg0: i32, %arg1: i32, %arg2: memref<8x32xf32, #tpu.memory_space<vmem>>, %arg3: memref<8x32xf32, #tpu.memory_space<vmem>>, %arg4: memref<8x1xf32, #tpu.memory_space<vmem>>, %arg5: memref<8x1xf32, #tpu.memory_space<vmem>>) attributes {dimension_semantics = [#tpu.dimension_semantics<parallel>, #tpu.dimension_semantics<arbitrary>], iteration_bounds = array<i64: 1, 1>, scalar_prefetch = 0 : i64, scratch_operands = 1 : i64, tpu.core_type = #tpu.core_type<tc>, window_params = [{transform_indices = @transform_0, window_bounds = array<i64: 8, 32>}, {transform_indices = @transform_1, window_bounds = array<i64: 8, 32>}, {transform_indices = @transform_2, window_bounds = array<i64: 8, 1>}]} {
    %c0_i32 = arith.constant 0 : i32
    %0 = arith.cmpi eq, %arg1, %c0_i32 : i32
    %1 = arith.extui %0 : i1 to i32
    %c0_i32_0 = arith.constant 0 : i32
    %2 = arith.cmpi ne, %1, %c0_i32_0 : i32
    scf.if %2 {
      %cst_12 = arith.constant 0.000000e+00 : f32
      %23 = vector.broadcast %cst_12 : f32 to vector<8x1xf32>
      %c0_13 = arith.constant 0 : index
      %c0_14 = arith.constant 0 : index
      %24 = vector.load %arg5[%c0_13, %c0_14] : memref<8x1xf32, #tpu.memory_space<vmem>>, vector<8x1xf32>
      tpu.vector_store %arg5[%c0_13, %c0_14], %23 {strides = array<i32>} : memref<8x1xf32, #tpu.memory_space<vmem>>, vector<8x1xf32>,
    } else {
    }
    %c0 = arith.constant 0 : index
    %c0_1 = arith.constant 0 : index
    %3 = vector.load %arg2[%c0, %c0_1] : memref<8x32xf32, #tpu.memory_space<vmem>>, vector<8x32xf32>
    %c0_2 = arith.constant 0 : index
    %c0_3 = arith.constant 0 : index
    %4 = vector.load %arg3[%c0_2, %c0_3] : memref<8x32xf32, #tpu.memory_space<vmem>>, vector<8x32xf32>
    %cst = arith.constant dense<0.000000e+00> : vector<8x8xf32>
    %5 = tpu.matmul %3, %4, %cst {dimension_numbers = #tpu.dot_dimension_numbers<[1], [1], [0], [0], [0, 0, 1, 0], [], []>, precision = #tpu.contract_precision<fp32>} : vector<8x32xf32>, vector<8x32xf32>, vector<8x8xf32> -> vector<8x8xf32>
    %6 = math.exp %5 : vector<8x8xf32>
    %7 = tpu.iota {dimensions = array<i32: 0>} : vector<8x8xi32>
    %8 = tpu.iota {dimensions = array<i32: 1>} : vector<8x8xi32>
    %9 = arith.cmpi eq, %7, %8 : vector<8x8xi32>
    %10 = arith.cmpi eq, %arg0, %arg1 : i32
    %11 = vector.broadcast %10 : i1 to vector<8x8xi1>
    %12 = arith.andi %11, %9 : vector<8x8xi1>
    %cst_4 = arith.constant 0.000000e+00 : f32
    %13 = vector.broadcast %cst_4 : f32 to vector<8x8xf32>
    %14 = arith.select %12, %13, %6 : vector<8x8xi1>, vector<8x8xf32>
    %c0_5 = arith.constant 0 : index
    %c0_6 = arith.constant 0 : index
    %15 = vector.load %arg5[%c0_5, %c0_6] : memref<8x1xf32, #tpu.memory_space<vmem>>, vector<8x1xf32>
    %cst_7 = arith.constant dense<0.000000e+00> : vector<8xf32>
    %16 = vector.multi_reduction <add>, %14, %cst_7 [1] : vector<8x8xf32> to vector<8xf32>
    %17 = vector.shape_cast %16 : vector<8xf32> to vector<8x1xf32>
    %18 = arith.addf %15, %17 : vector<8x1xf32>
    %c0_8 = arith.constant 0 : index
    %c0_9 = arith.constant 0 : index
    %19 = vector.load %arg5[%c0_8, %c0_9] : memref<8x1xf32, #tpu.memory_space<vmem>>, vector<8x1xf32>
    tpu.vector_store %arg5[%c0_8, %c0_9], %18 {strides = array<i32>} : memref<8x1xf32, #tpu.memory_space<vmem>>, vector<8x1xf32>,
    %c0_i32_10 = arith.constant 0 : i32
    %20 = arith.cmpi eq, %arg1, %c0_i32_10 : i32
    %21 = arith.extui %20 : i1 to i32
    %c0_i32_11 = arith.constant 0 : i32
    %22 = arith.cmpi ne, %21, %c0_i32_11 : i32
    scf.if %22 {
      %c0_12 = arith.constant 0 : index
      %c0_13 = arith.constant 0 : index
      %23 = vector.load %arg5[%c0_12, %c0_13] : memref<8x1xf32, #tpu.memory_space<vmem>>, vector<8x1xf32>
      %24 = math.log %23 : vector<8x1xf32>
      %c0_14 = arith.constant 0 : index
      %c0_15 = arith.constant 0 : index
      %25 = vector.load %arg4[%c0_14, %c0_15] : memref<8x1xf32, #tpu.memory_space<vmem>>, vector<8x1xf32>
      tpu.vector_store %arg4[%c0_14, %c0_15], %24 {strides = array<i32>} : memref<8x1xf32, #tpu.memory_space<vmem>>, vector<8x1xf32>,
    } else {
    }
    return
  }
  func.func @transform_0(%arg0: i32, %arg1: i32) -> (i32, i32) {
    %c0_i32 = arith.constant 0 : i32
    %c0_i32_0 = arith.constant 0 : i32
    return %arg0, %c0_i32 : i32, i32
  }
  func.func @transform_1(%arg0: i32, %arg1: i32) -> (i32, i32) {
    %c0_i32 = arith.constant 0 : i32
    %c0_i32_0 = arith.constant 0 : i32
    return %arg1, %c0_i32 : i32, i32
  }
  func.func @transform_2(%arg0: i32, %arg1: i32) -> (i32, i32) {
    %c0_i32 = arith.constant 0 : i32
    %c0_i32_0 = arith.constant 0 : i32
    return %arg0, %c0_i32 : i32, i32
  }
}

</mosaic_0001>

<llo_original>
// kernel: tpu_custom_call.1
$region0: #{tpu_custom_call.1}
  #allocation0 [shape = 'u32[]', space=smem, size = 0x4, offset = 0x4, fixed_abs, tag = 'smem constant byte address 0x4 - core index']
  #allocation1 [shape = 'u32[144,128]{1,0:T(1,128)}', space=vmem, size = 0x12000, scoped, tag = 'internal scratch']
  #allocation2 [shape = 'f32[8,1]{1,0:T(8,128)}', space=vmem, size = 0x1000, scoped, tag = 'scratch operand']
  %s0 = inlined_call_operand.hbm [shape: f32[8,32], index: 0, kind: input, shape index: {}]
  %s1 = inlined_call_operand.hbm [shape: f32[8,32], index: 1, kind: input, shape index: {}]
  %s2 = inlined_call_operand.vmem [shape: f32[8,1], index: 2, kind: output, shape index: {}]
  %s3 = sld [smem:[#allocation0]]
  $region34: #{tpu_custom_call.1} parent=0
    _
  %s5 = ssub.s32 1, %s3
  %s6 = scalar_select 0, %s5, %s3
  $region1: #{tpu_custom_call.1} parent=0
    #allocation3 [shape = 'u8[4096]{0}', space=vmem, size = 0x1000, scoped, tag = 'input window, operand 0, single buffered']
    #allocation4 [shape = 's32[1]{0}', space=sflag, size = 0x4, scoped, tag = 'scoped memory for tpu_custom_call.1']
    #allocation5 [shape = 'u8[4096]{0}', space=vmem, size = 0x1000, scoped, tag = 'input window, operand 1, single buffered']
    #allocation6 [shape = 's32[1]{0}', space=sflag, size = 0x4, scoped, tag = 'scoped memory for tpu_custom_call.1']
    %7 = vsyncpa [#allocation4], 0
    %8 = vsyncpa [#allocation6], 0
    // Predicated region
    $region2: #{tpu_custom_call.1} parent=1 // pred_check
      _
    $region3: #{tpu_custom_call.1} parent=1 // pred_check_branch
      %10 = sbr.rel (0) target = $region5
    $region4: #{tpu_custom_call.1} parent=1 // pred_region
      %s12 = ssub.s32 128, 128
      %13 = vsyncadd [#allocation4], %s12
      %s15 = sshll.u32 [#allocation3], 4
      %s16 = int_to_ptr.vmem [resolvable:$true] %s15
      %18 = dma.hbm_to_vmem [thread:$0]  %s0, 128, %s16, [#allocation4]
    $region5: #{tpu_custom_call.1} parent=1 // pred_fallthru
      _
    // Predicated region
    $region6: #{tpu_custom_call.1} parent=1 // pred_check
      _
    $region7: #{tpu_custom_call.1} parent=1 // pred_check_branch
      %20 = sbr.rel (0) target = $region9
    $region8: #{tpu_custom_call.1} parent=1 // pred_region
      %s22 = ssub.s32 128, 128
      %23 = vsyncadd [#allocation6], %s22
      %s25 = sshll.u32 [#allocation5], 4
      %s26 = int_to_ptr.vmem [resolvable:$true] %s25
      %28 = dma.hbm_to_vmem [thread:$0]  %s1, 128, %s26, [#allocation6]
    $region9: #{tpu_custom_call.1} parent=1 // pred_fallthru
      _
    // Predicated region
    $region10: #{tpu_custom_call.1} parent=1 // pred_check
      _
    $region11: #{tpu_custom_call.1} parent=1 // pred_check_branch
      %30 = sbr.rel (0) target = $region13
    $region12: #{tpu_custom_call.1} parent=1 // pred_region
      %31 = dma.done [#allocation4], 128
    $region13: #{tpu_custom_call.1} parent=1 // pred_fallthru
      _
    // Predicated region
    $region14: #{tpu_custom_call.1} parent=1 // pred_check
      _
    $region15: #{tpu_custom_call.1} parent=1 // pred_check_branch
      %33 = sbr.rel (0) target = $region17
    $region16: #{tpu_custom_call.1} parent=1 // pred_region
      %34 = dma.done [#allocation6], 128
    $region17: #{tpu_custom_call.1} parent=1 // pred_fallthru
      _
    %p35 = scmp.eq.s32.totalorder 0, 0
    // Predicated region
    $region18: #{tpu_custom_call.1} parent=1 // pred_check
      %p36 = pneg %p35
    $region19: #{tpu_custom_call.1} parent=1 // pred_check_branch
      %38 = sbr.rel (%p36) target = $region21
    $region20: #{tpu_custom_call.1} parent=1 // pred_region
      %vm39 = vcmask 7168
      %40 = vst.msk [vmem:[#allocation2] sm:$0xff] %vm39, 0.0
    $region21: #{tpu_custom_call.1} parent=1 // pred_fallthru
      _
    %v41 = vld [vmem:[#allocation3] sm:$0xff]
    %v42 = vld [vmem:[#allocation5] sm:$0xff]
    %vm43 = vcmask 261120
    %v45 = vsel %vm43, %v41, 0
    %v48 = vsel %vm43, %v42, 0
    %50 = vmatprep.subr.mxu0 0.0
    %v51 = vand.u32 %v48, 4294901760
    %52 = vmatpush1.xpose.msra.mxu0 %v51
    %53 = vmatprep.subr.mxu0 0.0
    %54 = vmatpush1.xpose.msra.mxu0 0.0
    %55 = vmatprep.subr.mxu0 0.0
    %56 = vmatpush1.xpose.msra.mxu0 0.0
    %57 = vmatprep.subr.mxu0 0.0
    %58 = vmatpush1.xpose.msra.mxu0 0.0
    %59 = vmatprep.subr.mxu0 0.0
    %60 = vmatpush1.xpose.msra.mxu0 0.0
    %61 = vmatprep.subr.mxu0 0.0
    %62 = vmatpush1.xpose.msra.mxu0 0.0
    %63 = vmatprep.subr.mxu0 0.0
    %64 = vmatpush1.xpose.msra.mxu0 0.0
    %65 = vmatprep.subr.mxu0 0.0
    %66 = vmatpush1.xpose.msra.mxu0 0.0
    %67 = vmatprep.subr.mxu0 0.0
    %68 = vmatpush1.xpose.msra.mxu0 0.0
    %69 = vmatprep.subr.mxu0 0.0
    %70 = vmatpush1.xpose.msra.mxu0 0.0
    %71 = vmatprep.subr.mxu0 0.0
    %72 = vmatpush1.xpose.msra.mxu0 0.0
    %73 = vmatprep.subr.mxu0 0.0
    %74 = vmatpush1.xpose.msra.mxu0 0.0
    %75 = vmatprep.subr.mxu0 0.0
    %76 = vmatpush1.xpose.msra.mxu0 0.0
    %77 = vmatprep.subr.mxu0 0.0
    %78 = vmatpush1.xpose.msra.mxu0 0.0
    %79 = vmatprep.subr.mxu0 0.0
    %80 = vmatpush1.xpose.msra.mxu0 0.0
    %81 = vmatprep.subr.mxu0 0.0
    %82 = vmatpush1.xpose.msra.mxu0 0.0
    %83 = vmatprep.subr.mxu0 0.0
    %84 = vmatpush1.xpose.msra.mxu0 0.0
    %85 = vmatprep.subr.mxu0 0.0
    %86 = vmatpush1.xpose.msra.mxu0 0.0
    %87 = vmatprep.subr.mxu0 0.0
    %88 = vmatpush1.xpose.msra.mxu0 0.0
    %89 = vmatprep.subr.mxu0 0.0
    %90 = vmatpush1.xpose.msra.mxu0 0.0
    %91 = vmatprep.subr.mxu0 0.0
    %92 = vmatpush1.xpose.msra.mxu0 0.0
    %93 = vmatprep.subr.mxu0 0.0
    %94 = vmatpush1.xpose.msra.mxu0 0.0
    %95 = vmatprep.subr.mxu0 0.0
    %96 = vmatpush1.xpose.msra.mxu0 0.0
    %97 = vmatprep.subr.mxu0 0.0
    %98 = vmatpush1.xpose.msra.mxu0 0.0
    %99 = vmatprep.subr.mxu0 0.0
    %100 = vmatpush1.xpose.msra.mxu0 0.0
    %101 = vmatprep.subr.mxu0 0.0
    %102 = vmatpush1.xpose.msra.mxu0 0.0
    %103 = vmatprep.subr.mxu0 0.0
    %104 = vmatpush1.xpose.msra.mxu0 0.0
    %105 = vmatprep.subr.mxu0 0.0
    %106 = vmatpush1.xpose.msra.mxu0 0.0
    %107 = vmatprep.subr.mxu0 0.0
    %108 = vmatpush1.xpose.msra.mxu0 0.0
    %109 = vmatprep.subr.mxu0 0.0
    %110 = vmatpush1.xpose.msra.mxu0 0.0
    %111 = vmatprep.subr.mxu0 0.0
    %112 = vmatpush1.xpose.msra.mxu0 0.0
    %113 = vmatprep.subr.mxu0 0.0
    %114 = vmatpush1.xpose.msra.mxu0 0.0
    %115 = vmatprep.mubr.f32.mxu0 0.0
    %v116 = vand.u32 %v45, 4294901760
    %v117 = vsub.f32 %v45, %v116
    %v118 = vand.u32 %v117, 4294901760
    %v119 = vsub.f32 %v117, %v118
    %v120 = vand.u32 %v119, 4294901760
    %121 = vmatmul.mubr.f32.gmra.mrb[0].mxu0 %v120
    %v122 = vpop.f32.mrb[0].mxu0
    %v123 = vadd.f32 0.0, %v122
    %v124 = vpop.f32.mrb[0].mxu0
    %125 = vdwg.mxu0
    %126 = vmatprep.subr.mxu0 0.0
    %v127 = vand.u32 %v48, 4294901760
    %v128 = vsub.f32 %v48, %v127
    %v129 = vand.u32 %v128, 4294901760
    %v130 = vsub.f32 %v128, %v129
    %v131 = vand.u32 %v130, 4294901760
    %132 = vmatpush1.xpose.msra.mxu0 %v131
    %133 = vmatprep.subr.mxu0 0.0
    %134 = vmatpush1.xpose.msra.mxu0 0.0
    %135 = vmatprep.subr.mxu0 0.0
    %136 = vmatpush1.xpose.msra.mxu0 0.0
    %137 = vmatprep.subr.mxu0 0.0
    %138 = vmatpush1.xpose.msra.mxu0 0.0
    %139 = vmatprep.subr.mxu0 0.0
    %140 = vmatpush1.xpose.msra.mxu0 0.0
    %141 = vmatprep.subr.mxu0 0.0
    %142 = vmatpush1.xpose.msra.mxu0 0.0
    %143 = vmatprep.subr.mxu0 0.0
    %144 = vmatpush1.xpose.msra.mxu0 0.0
    %145 = vmatprep.subr.mxu0 0.0
    %146 = vmatpush1.xpose.msra.mxu0 0.0
    %147 = vmatprep.subr.mxu0 0.0
    %148 = vmatpush1.xpose.msra.mxu0 0.0
    %149 = vmatprep.subr.mxu0 0.0
    %150 = vmatpush1.xpose.msra.mxu0 0.0
    %151 = vmatprep.subr.mxu0 0.0
    %152 = vmatpush1.xpose.msra.mxu0 0.0
    %153 = vmatprep.subr.mxu0 0.0
    %154 = vmatpush1.xpose.msra.mxu0 0.0
    %155 = vmatprep.subr.mxu0 0.0
    %156 = vmatpush1.xpose.msra.mxu0 0.0
    %157 = vmatprep.subr.mxu0 0.0
    %158 = vmatpush1.xpose.msra.mxu0 0.0
    %159 = vmatprep.subr.mxu0 0.0
    %160 = vmatpush1.xpose.msra.mxu0 0.0
    %161 = vmatprep.subr.mxu0 0.0
    %162 = vmatpush1.xpose.msra.mxu0 0.0
    %163 = vmatprep.subr.mxu0 0.0
    %164 = vmatpush1.xpose.msra.mxu0 0.0
    %165 = vmatprep.subr.mxu0 0.0
    %166 = vmatpush1.xpose.msra.mxu0 0.0
    %167 = vmatprep.subr.mxu0 0.0
    %168 = vmatpush1.xpose.msra.mxu0 0.0
    %169 = vmatprep.subr.mxu0 0.0
    %170 = vmatpush1.xpose.msra.mxu0 0.0
    %171 = vmatprep.subr.mxu0 0.0
    %172 = vmatpush1.xpose.msra.mxu0 0.0
    %173 = vmatprep.subr.mxu0 0.0
    %174 = vmatpush1.xpose.msra.mxu0 0.0
    %175 = vmatprep.subr.mxu0 0.0
    %176 = vmatpush1.xpose.msra.mxu0 0.0
    %177 = vmatprep.subr.mxu0 0.0
    %178 = vmatpush1.xpose.msra.mxu0 0.0
    %179 = vmatprep.subr.mxu0 0.0
    %180 = vmatpush1.xpose.msra.mxu0 0.0
    %181 = vmatprep.subr.mxu0 0.0
    %182 = vmatpush1.xpose.msra.mxu0 0.0
    %183 = vmatprep.subr.mxu0 0.0
    %184 = vmatpush1.xpose.msra.mxu0 0.0
    %185 = vmatprep.subr.mxu0 0.0
    %186 = vmatpush1.xpose.msra.mxu0 0.0
    %187 = vmatprep.subr.mxu0 0.0
    %188 = vmatpush1.xpose.msra.mxu0 0.0
    %189 = vmatprep.subr.mxu0 0.0
    %190 = vmatpush1.xpose.msra.mxu0 0.0
    %191 = vmatprep.subr.mxu0 0.0
    %192 = vmatpush1.xpose.msra.mxu0 0.0
    %193 = vmatprep.subr.mxu0 0.0
    %194 = vmatpush1.xpose.msra.mxu0 0.0
    %195 = vmatprep.mubr.f32.mxu0 0.0
    %v196 = vand.u32 %v45, 4294901760
    %197 = vmatmul.mubr.f32.gmra.mrb[0].mxu0 %v196
    %v198 = vpop.f32.mrb[0].mxu0
    %v199 = vadd.f32 %v123, %v198
    %v200 = vpop.f32.mrb[0].mxu0
    %201 = vdwg.mxu0
    %202 = vmatprep.subr.mxu0 0.0
    %v203 = vand.u32 %v48, 4294901760
    %v204 = vsub.f32 %v48, %v203
    %205 = vmatpush1.xpose.msra.mxu0 %v204
    %206 = vmatprep.subr.mxu0 0.0
    %207 = vmatpush1.xpose.msra.mxu0 0.0
    %208 = vmatprep.subr.mxu0 0.0
    %209 = vmatpush1.xpose.msra.mxu0 0.0
    %210 = vmatprep.subr.mxu0 0.0
    %211 = vmatpush1.xpose.msra.mxu0 0.0
    %212 = vmatprep.subr.mxu0 0.0
    %213 = vmatpush1.xpose.msra.mxu0 0.0
    %214 = vmatprep.subr.mxu0 0.0
    %215 = vmatpush1.xpose.msra.mxu0 0.0
    %216 = vmatprep.subr.mxu0 0.0
    %217 = vmatpush1.xpose.msra.mxu0 0.0
    %218 = vmatprep.subr.mxu0 0.0
    %219 = vmatpush1.xpose.msra.mxu0 0.0
    %220 = vmatprep.subr.mxu0 0.0
    %221 = vmatpush1.xpose.msra.mxu0 0.0
    %222 = vmatprep.subr.mxu0 0.0
    %223 = vmatpush1.xpose.msra.mxu0 0.0
    %224 = vmatprep.subr.mxu0 0.0
    %225 = vmatpush1.xpose.msra.mxu0 0.0
    %226 = vmatprep.subr.mxu0 0.0
    %227 = vmatpush1.xpose.msra.mxu0 0.0
    %228 = vmatprep.subr.mxu0 0.0
    %229 = vmatpush1.xpose.msra.mxu0 0.0
    %230 = vmatprep.subr.mxu0 0.0
    %231 = vmatpush1.xpose.msra.mxu0 0.0
    %232 = vmatprep.subr.mxu0 0.0
    %233 = vmatpush1.xpose.msra.mxu0 0.0
    %234 = vmatprep.subr.mxu0 0.0
    %235 = vmatpush1.xpose.msra.mxu0 0.0
    %236 = vmatprep.subr.mxu0 0.0
    %237 = vmatpush1.xpose.msra.mxu0 0.0
    %238 = vmatprep.subr.mxu0 0.0
    %239 = vmatpush1.xpose.msra.mxu0 0.0
    %240 = vmatprep.subr.mxu0 0.0
    %241 = vmatpush1.xpose.msra.mxu0 0.0
    %242 = vmatprep.subr.mxu0 0.0
    %243 = vmatpush1.xpose.msra.mxu0 0.0
    %244 = vmatprep.subr.mxu0 0.0
    %245 = vmatpush1.xpose.msra.mxu0 0.0
    %246 = vmatprep.subr.mxu0 0.0
    %247 = vmatpush1.xpose.msra.mxu0 0.0
    %248 = vmatprep.subr.mxu0 0.0
    %249 = vmatpush1.xpose.msra.mxu0 0.0
    %250 = vmatprep.subr.mxu0 0.0
    %251 = vmatpush1.xpose.msra.mxu0 0.0
    %252 = vmatprep.subr.mxu0 0.0
    %253 = vmatpush1.xpose.msra.mxu0 0.0
    %254 = vmatprep.subr.mxu0 0.0
    %255 = vmatpush1.xpose.msra.mxu0 0.0
    %256 = vmatprep.subr.mxu0 0.0
    %257 = vmatpush1.xpose.msra.mxu0 0.0
    %258 = vmatprep.subr.mxu0 0.0
    %259 = vmatpush1.xpose.msra.mxu0 0.0
    %260 = vmatprep.subr.mxu0 0.0
    %261 = vmatpush1.xpose.msra.mxu0 0.0
    %262 = vmatprep.subr.mxu0 0.0
    %263 = vmatpush1.xpose.msra.mxu0 0.0
    %264 = vmatprep.subr.mxu0 0.0
    %265 = vmatpush1.xpose.msra.mxu0 0.0
    %266 = vmatprep.subr.mxu0 0.0
    %267 = vmatpush1.xpose.msra.mxu0 0.0
    %268 = vmatprep.mubr.f32.mxu0 0.0
    %v269 = vand.u32 %v45, 4294901760
    %v270 = vsub.f32 %v45, %v269
    %271 = vmatmul.mubr.f32.gmra.mrb[0].mxu0 %v270
    %v272 = vpop.f32.mrb[0].mxu0
    %v273 = vadd.f32 %v199, %v272
    %v274 = vpop.f32.mrb[0].mxu0
    %275 = vdwg.mxu0
    %276 = vmatprep.subr.mxu0 0.0
    %v277 = vand.u32 %v48, 4294901760
    %278 = vmatpush1.xpose.msra.mxu0 %v277
    %279 = vmatprep.subr.mxu0 0.0
    %280 = vmatpush1.xpose.msra.mxu0 0.0
    %281 = vmatprep.subr.mxu0 0.0
    %282 = vmatpush1.xpose.msra.mxu0 0.0
    %283 = vmatprep.subr.mxu0 0.0
    %284 = vmatpush1.xpose.msra.mxu0 0.0
    %285 = vmatprep.subr.mxu0 0.0
    %286 = vmatpush1.xpose.msra.mxu0 0.0
    %287 = vmatprep.subr.mxu0 0.0
    %288 = vmatpush1.xpose.msra.mxu0 0.0
    %289 = vmatprep.subr.mxu0 0.0
    %290 = vmatpush1.xpose.msra.mxu0 0.0
    %291 = vmatprep.subr.mxu0 0.0
    %292 = vmatpush1.xpose.msra.mxu0 0.0
    %293 = vmatprep.subr.mxu0 0.0
    %294 = vmatpush1.xpose.msra.mxu0 0.0
    %295 = vmatprep.subr.mxu0 0.0
    %296 = vmatpush1.xpose.msra.mxu0 0.0
    %297 = vmatprep.subr.mxu0 0.0
    %298 = vmatpush1.xpose.msra.mxu0 0.0
    %299 = vmatprep.subr.mxu0 0.0
    %300 = vmatpush1.xpose.msra.mxu0 0.0
    %301 = vmatprep.subr.mxu0 0.0
    %302 = vmatpush1.xpose.msra.mxu0 0.0
    %303 = vmatprep.subr.mxu0 0.0
    %304 = vmatpush1.xpose.msra.mxu0 0.0
    %305 = vmatprep.subr.mxu0 0.0
    %306 = vmatpush1.xpose.msra.mxu0 0.0
    %307 = vmatprep.subr.mxu0 0.0
    %308 = vmatpush1.xpose.msra.mxu0 0.0
    %309 = vmatprep.subr.mxu0 0.0
    %310 = vmatpush1.xpose.msra.mxu0 0.0
    %311 = vmatprep.subr.mxu0 0.0
    %312 = vmatpush1.xpose.msra.mxu0 0.0
    %313 = vmatprep.subr.mxu0 0.0
    %314 = vmatpush1.xpose.msra.mxu0 0.0
    %315 = vmatprep.subr.mxu0 0.0
    %316 = vmatpush1.xpose.msra.mxu0 0.0
    %317 = vmatprep.subr.mxu0 0.0
    %318 = vmatpush1.xpose.msra.mxu0 0.0
    %319 = vmatprep.subr.mxu0 0.0
    %320 = vmatpush1.xpose.msra.mxu0 0.0
    %321 = vmatprep.subr.mxu0 0.0
    %322 = vmatpush1.xpose.msra.mxu0 0.0
    %323 = vmatprep.subr.mxu0 0.0
    %324 = vmatpush1.xpose.msra.mxu0 0.0
    %325 = vmatprep.subr.mxu0 0.0
    %326 = vmatpush1.xpose.msra.mxu0 0.0
    %327 = vmatprep.subr.mxu0 0.0
    %328 = vmatpush1.xpose.msra.mxu0 0.0
    %329 = vmatprep.subr.mxu0 0.0
    %330 = vmatpush1.xpose.msra.mxu0 0.0
    %331 = vmatprep.subr.mxu0 0.0
    %332 = vmatpush1.xpose.msra.mxu0 0.0
    %333 = vmatprep.subr.mxu0 0.0
    %334 = vmatpush1.xpose.msra.mxu0 0.0
    %335 = vmatprep.subr.mxu0 0.0
    %336 = vmatpush1.xpose.msra.mxu0 0.0
    %337 = vmatprep.subr.mxu0 0.0
    %338 = vmatpush1.xpose.msra.mxu0 0.0
    %339 = vmatprep.subr.mxu0 0.0
    %340 = vmatpush1.xpose.msra.mxu0 0.0
    %341 = vmatprep.mubr.f32.mxu0 0.0
    %v342 = vand.u32 %v45, 4294901760
    %v343 = vsub.f32 %v45, %v342
    %v344 = vand.u32 %v343, 4294901760
    %345 = vmatmul.mubr.f32.gmra.mrb[0].mxu0 %v344
    %v346 = vpop.f32.mrb[0].mxu0
    %v347 = vadd.f32 %v273, %v346
    %v348 = vpop.f32.mrb[0].mxu0
    %349 = vdwg.mxu0
    %350 = vmatprep.subr.mxu0 0.0
    %v351 = vand.u32 %v48, 4294901760
    %v352 = vsub.f32 %v48, %v351
    %v353 = vand.u32 %v352, 4294901760
    %354 = vmatpush1.xpose.msra.mxu0 %v353
    %355 = vmatprep.subr.mxu0 0.0
    %356 = vmatpush1.xpose.msra.mxu0 0.0
    %357 = vmatprep.subr.mxu0 0.0
    %358 = vmatpush1.xpose.msra.mxu0 0.0
    %359 = vmatprep.subr.mxu0 0.0
    %360 = vmatpush1.xpose.msra.mxu0 0.0
    %361 = vmatprep.subr.mxu0 0.0
    %362 = vmatpush1.xpose.msra.mxu0 0.0
    %363 = vmatprep.subr.mxu0 0.0
    %364 = vmatpush1.xpose.msra.mxu0 0.0
    %365 = vmatprep.subr.mxu0 0.0
    %366 = vmatpush1.xpose.msra.mxu0 0.0
    %367 = vmatprep.subr.mxu0 0.0
    %368 = vmatpush1.xpose.msra.mxu0 0.0
    %369 = vmatprep.subr.mxu0 0.0
    %370 = vmatpush1.xpose.msra.mxu0 0.0
    %371 = vmatprep.subr.mxu0 0.0
    %372 = vmatpush1.xpose.msra.mxu0 0.0
    %373 = vmatprep.subr.mxu0 0.0
    %374 = vmatpush1.xpose.msra.mxu0 0.0
    %375 = vmatprep.subr.mxu0 0.0
    %376 = vmatpush1.xpose.msra.mxu0 0.0
    %377 = vmatprep.subr.mxu0 0.0
    %378 = vmatpush1.xpose.msra.mxu0 0.0
    %379 = vmatprep.subr.mxu0 0.0
    %380 = vmatpush1.xpose.msra.mxu0 0.0
    %381 = vmatprep.subr.mxu0 0.0
    %382 = vmatpush1.xpose.msra.mxu0 0.0
    %383 = vmatprep.subr.mxu0 0.0
    %384 = vmatpush1.xpose.msra.mxu0 0.0
    %385 = vmatprep.subr.mxu0 0.0
    %386 = vmatpush1.xpose.msra.mxu0 0.0
    %387 = vmatprep.subr.mxu0 0.0
    %388 = vmatpush1.xpose.msra.mxu0 0.0
    %389 = vmatprep.subr.mxu0 0.0
    %390 = vmatpush1.xpose.msra.mxu0 0.0
    %391 = vmatprep.subr.mxu0 0.0
    %392 = vmatpush1.xpose.msra.mxu0 0.0
    %393 = vmatprep.subr.mxu0 0.0
    %394 = vmatpush1.xpose.msra.mxu0 0.0
    %395 = vmatprep.subr.mxu0 0.0
    %396 = vmatpush1.xpose.msra.mxu0 0.0
    %397 = vmatprep.subr.mxu0 0.0
    %398 = vmatpush1.xpose.msra.mxu0 0.0
    %399 = vmatprep.subr.mxu0 0.0
    %400 = vmatpush1.xpose.msra.mxu0 0.0
    %401 = vmatprep.subr.mxu0 0.0
    %402 = vmatpush1.xpose.msra.mxu0 0.0
    %403 = vmatprep.subr.mxu0 0.0
    %404 = vmatpush1.xpose.msra.mxu0 0.0
    %405 = vmatprep.subr.mxu0 0.0
    %406 = vmatpush1.xpose.msra.mxu0 0.0
    %407 = vmatprep.subr.mxu0 0.0
    %408 = vmatpush1.xpose.msra.mxu0 0.0
    %409 = vmatprep.subr.mxu0 0.0
    %410 = vmatpush1.xpose.msra.mxu0 0.0
    %411 = vmatprep.subr.mxu0 0.0
    %412 = vmatpush1.xpose.msra.mxu0 0.0
    %413 = vmatprep.subr.mxu0 0.0
    %414 = vmatpush1.xpose.msra.mxu0 0.0
    %415 = vmatprep.subr.mxu0 0.0
    %416 = vmatpush1.xpose.msra.mxu0 0.0
    %417 = vmatprep.mubr.f32.mxu0 0.0
    %v418 = vand.u32 %v45, 4294901760
    %419 = vmatmul.mubr.f32.gmra.mrb[0].mxu0 %v418
    %v420 = vpop.f32.mrb[0].mxu0
    %v421 = vadd.f32 %v347, %v420
    %v422 = vpop.f32.mrb[0].mxu0
    %423 = vdwg.mxu0
    %424 = vmatprep.subr.mxu0 0.0
    %v425 = vand.u32 %v48, 4294901760
    %426 = vmatpush1.xpose.msra.mxu0 %v425
    %427 = vmatprep.subr.mxu0 0.0
    %428 = vmatpush1.xpose.msra.mxu0 0.0
    %429 = vmatprep.subr.mxu0 0.0
    %430 = vmatpush1.xpose.msra.mxu0 0.0
    %431 = vmatprep.subr.mxu0 0.0
    %432 = vmatpush1.xpose.msra.mxu0 0.0
    %433 = vmatprep.subr.mxu0 0.0
    %434 = vmatpush1.xpose.msra.mxu0 0.0
    %435 = vmatprep.subr.mxu0 0.0
    %436 = vmatpush1.xpose.msra.mxu0 0.0
    %437 = vmatprep.subr.mxu0 0.0
    %438 = vmatpush1.xpose.msra.mxu0 0.0
    %439 = vmatprep.subr.mxu0 0.0
    %440 = vmatpush1.xpose.msra.mxu0 0.0
    %441 = vmatprep.subr.mxu0 0.0
    %442 = vmatpush1.xpose.msra.mxu0 0.0
    %443 = vmatprep.subr.mxu0 0.0
    %444 = vmatpush1.xpose.msra.mxu0 0.0
    %445 = vmatprep.subr.mxu0 0.0
    %446 = vmatpush1.xpose.msra.mxu0 0.0
    %447 = vmatprep.subr.mxu0 0.0
    %448 = vmatpush1.xpose.msra.mxu0 0.0
    %449 = vmatprep.subr.mxu0 0.0
    %450 = vmatpush1.xpose.msra.mxu0 0.0
    %451 = vmatprep.subr.mxu0 0.0
    %452 = vmatpush1.xpose.msra.mxu0 0.0
    %453 = vmatprep.subr.mxu0 0.0
    %454 = vmatpush1.xpose.msra.mxu0 0.0
    %455 = vmatprep.subr.mxu0 0.0
    %456 = vmatpush1.xpose.msra.mxu0 0.0
    %457 = vmatprep.subr.mxu0 0.0
    %458 = vmatpush1.xpose.msra.mxu0 0.0
    %459 = vmatprep.subr.mxu0 0.0
    %460 = vmatpush1.xpose.msra.mxu0 0.0
    %461 = vmatprep.subr.mxu0 0.0
    %462 = vmatpush1.xpose.msra.mxu0 0.0
    %463 = vmatprep.subr.mxu0 0.0
    %464 = vmatpush1.xpose.msra.mxu0 0.0
    %465 = vmatprep.subr.mxu0 0.0
    %466 = vmatpush1.xpose.msra.mxu0 0.0
    %467 = vmatprep.subr.mxu0 0.0
    %468 = vmatpush1.xpose.msra.mxu0 0.0
    %469 = vmatprep.subr.mxu0 0.0
    %470 = vmatpush1.xpose.msra.mxu0 0.0
    %471 = vmatprep.subr.mxu0 0.0
    %472 = vmatpush1.xpose.msra.mxu0 0.0
    %473 = vmatprep.subr.mxu0 0.0
    %474 = vmatpush1.xpose.msra.mxu0 0.0
    %475 = vmatprep.subr.mxu0 0.0
    %476 = vmatpush1.xpose.msra.mxu0 0.0
    %477 = vmatprep.subr.mxu0 0.0
    %478 = vmatpush1.xpose.msra.mxu0 0.0
    %479 = vmatprep.subr.mxu0 0.0
    %480 = vmatpush1.xpose.msra.mxu0 0.0
    %481 = vmatprep.subr.mxu0 0.0
    %482 = vmatpush1.xpose.msra.mxu0 0.0
    %483 = vmatprep.subr.mxu0 0.0
    %484 = vmatpush1.xpose.msra.mxu0 0.0
    %485 = vmatprep.subr.mxu0 0.0
    %486 = vmatpush1.xpose.msra.mxu0 0.0
    %487 = vmatprep.subr.mxu0 0.0
    %488 = vmatpush1.xpose.msra.mxu0 0.0
    %489 = vmatprep.mubr.f32.mxu0 0.0
    %v490 = vand.u32 %v45, 4294901760
    %491 = vmatmul.mubr.f32.gmra.mrb[0].mxu0 %v490
    %v492 = vpop.f32.mrb[0].mxu0
    %v493 = vadd.f32 %v421, %v492
    %v494 = vpop.f32.mrb[0].mxu0
    %495 = vdwg.mxu0
    %v496 = vmul.f32 %v493, 1.442695
    %v497 = vpow.pop %v496
    %v498 = vlaneseq
    %v499 = vshrl.u32 %v498, 7
    %v500 = vlaneseq
    %v501 = vand.u32 %v500, 127
    %vm502 = vcmp.eq.s32.totalorder %v499, %v501
    %p503 = scmp.eq.s32.totalorder 0, 0
    %s504 = scalar_select %p503, 1, 0
    %v505 = vstv %s504
    %vm506 = vcmp.eq.s32.totalorder %v505, 1
    %vm507 = vmand %vm506, %vm502
    %v508 = vsel %vm507, 0.0, %v497
    %v509 = vld [vmem:[#allocation2] sm:$0xff]
    %vm510 = vcmask 64512
    %v511 = vsel %vm510, %v508, 0.0
    %512 = vadd.xlane.f32.xlu0 %v511
    %v513 = vpop.xlane.xlu0 %512
    %v514 = vadd.f32 %v509, %v513
    %vm515 = vcmask 7168
    %516 = vst.msk [vmem:[#allocation2] sm:$0xff] %vm515, %v514
    // Predicated region
    $region22: #{tpu_custom_call.1} parent=1 // pred_check
      %p517 = pneg %p35
    $region23: #{tpu_custom_call.1} parent=1 // pred_check_branch
      %519 = sbr.rel (%p517) target = $region25
    $region24: #{tpu_custom_call.1} parent=1 // pred_region
      %v520 = vld [vmem:[#allocation2] sm:$0xff]
      %v521 = vlog2.pop %v520
      %v522 = vmul.f32 %v521, 0.6931472
      %523 = vst.msk [vmem:[%s2] sm:$0xff] %vm515, %v522
    $region25: #{tpu_custom_call.1} parent=1 // pred_fallthru
      _
    // Predicated region
    $region26: #{tpu_custom_call.1} parent=1 // pred_check
      _
    $region27: #{tpu_custom_call.1} parent=1 // pred_check_branch
      %525 = sbr.rel (0) target = $region29
    $region28: #{tpu_custom_call.1} parent=1 // pred_region
      _
    $region29: #{tpu_custom_call.1} parent=1 // pred_fallthru
      _
    // Predicated region
    $region30: #{tpu_custom_call.1} parent=1 // pred_check
      _
    $region31: #{tpu_custom_call.1} parent=1 // pred_check_branch
      %527 = sbr.rel (0) target = $region33
    $region32: #{tpu_custom_call.1} parent=1 // pred_region
      _
    $region33: #{tpu_custom_call.1} parent=1 // pred_fallthru
      _
    %528 = vsyncpa [#allocation4], 1
    %529 = vsyncpa [#allocation6], 1

</llo_original>
